<compile_context>
chip_gen: v6e
topology: v6e:2x2x1
jax: 0.10.0
libtpu: 0.0.40
codegen_flags: <defaults>
</compile_context>

<pallas_src>
import jax
import jax.numpy as jnp
from jax.experimental import pallas as pl
from jax.experimental.pallas import tpu as pltpu


def _round_up(x, m):
    return (x + m - 1) // m * m


def _pad_feature(d):
    # 128-lane padding is native everywhere; 256 only when large enough that
    # the extra padding traffic is amortized and the 256-wide MXU (v6e/v7x)
    # benefits from fully-fed K/N tiles.
    return _round_up(d, 256) if d >= 512 else _round_up(d, 128)


_VMEM_BUDGET = 48 * 1024 * 1024  # conservative vs v7x's 64 MiB physical VMEM


def _footprint_bytes(tile_b, Dp, Ep, out_isz):
    w = (Dp * Ep + Ep * Dp) * 2            # resident bf16 weights (Buffered(1))
    b = (Ep + Dp) * 4 * 2                  # f32 biases, double-buffered (tiny)
    xin = 2 * tile_b * Dp * 2              # bf16 x tile, double-buffered
    outs = 2 * tile_b * (Ep + Dp) * out_isz  # both outputs, double-buffered
    return w + b + xin + outs


def _choose_tile_b(B, Dp, Ep, out_isz):
    if B <= 128:
        return _round_up(B, 8)
    candidates = []
    for tb in (128, 256, 512):
        if _footprint_bytes(tb, Dp, Ep, out_isz) > _VMEM_BUDGET:
            continue
        b_pad = _round_up(B, tb)
        waste = b_pad - B                  # padded rows burn MXU/EUP/writeback
        too_few_steps = (b_pad // tb) < 2  # want >=2 steps for megacore/pipelining
        candidates.append((waste, too_few_steps, -tb, tb))
    if not candidates:
        # TODO(synk): if resident weights alone blow the VMEM budget, add a
        # K-tiling grid axis ("arbitrary") with an f32 VMEM accumulator.
        return 128
    return min(candidates)[3]


def autoencoder_kernel(x_ref, w1_ref, b1_ref, w2_ref, b2_ref, enc_ref, dec_ref):
    # x_ref:  (TB, Dp)  bf16 batch tile
    # w1_ref: (Dp, Ep)  bf16 encoder weight (transposed vs torch), b1_ref: (1, Ep) f32
    # w2_ref: (Ep, Dp)  bf16 decoder weight (transposed vs torch), b2_ref: (1, Dp) f32
    x = x_ref[...]  # already bf16

    # Encoder: Linear + ReLU (bf16 MXU matmul, f32 accumulate, f32 VPU max).
    h = jnp.dot(x, w1_ref[...], preferred_element_type=jnp.float32) + b1_ref[...]
    enc_bf16 = jnp.maximum(h, 0.0).astype(jnp.bfloat16)
    # Stored encoded == value the decoder consumes (consistent precision).
    enc_ref[...] = enc_bf16.astype(enc_ref.dtype)

    # Decoder: Linear + Sigmoid (bf16 MXU matmul, f32 accumulate, f32 EUP exp).
    d = jnp.dot(enc_bf16, w2_ref[...],
                preferred_element_type=jnp.float32) + b2_ref[...]
    dec_ref[...] = jax.nn.sigmoid(d).astype(dec_ref.dtype)


def prepare_params(w1, b1, w2, b2):
    """Pad + cast weights/biases once (not per forward). w1: (D, E), w2: (E, D),
    both pre-transposed vs torch's (out, in)."""
    D, E = w1.shape
    Dp, Ep = _pad_feature(D), _pad_feature(E)
    w1_pad = jnp.pad(w1.astype(jnp.bfloat16), ((0, Dp - D), (0, Ep - E)))
    b1_pad = jnp.pad(b1.reshape(1, E).astype(jnp.float32), ((0, 0), (0, Ep - E)))
    w2_pad = jnp.pad(w2.astype(jnp.bfloat16), ((0, Ep - E), (0, Dp - D)))
    b2_pad = jnp.pad(b2.reshape(1, D).astype(jnp.float32), ((0, 0), (0, Dp - D)))
    return dict(w1=w1_pad, b1=b1_pad, w2=w2_pad, b2=b2_pad,
                D=D, E=E, Dp=Dp, Ep=Ep)


def autoencoder_forward(x, params, *, tile_b=None, out_dtype=jnp.bfloat16):
    """x: (B, D) float32.  params: output of prepare_params.
    Returns (encoded (B, E), decoded (B, D)) in out_dtype."""
    B, D = x.shape
    assert D == params["D"], (D, params["D"])
    E, Dp, Ep = params["E"], params["Dp"], params["Ep"]
    out_isz = jnp.dtype(out_dtype).itemsize

    if tile_b is None:
        tile_b = _choose_tile_b(B, Dp, Ep, out_isz)
    tile_b = _round_up(tile_b, 8)
    B_pad = _round_up(B, tile_b)
    grid = (B_pad // tile_b,)

    # Single fused pad+cast pass over x (zero padding is numerically inert:
    # zero x cols meet zero w1 rows; padded batch rows are sliced off below).
    if B_pad != B or Dp != D:
        x_prep = jnp.pad(x, ((0, B_pad - B), (0, Dp - D))).astype(jnp.bfloat16)
    else:
        x_prep = x.astype(jnp.bfloat16)

    # VMEM budget: single-buffered weights + double-buffered x / output tiles.
    footprint = _footprint_bytes(tile_b, Dp, Ep, out_isz)
    vmem_limit = int(min(max(2 * footprint, 16 * 1024 * 1024), 64 * 1024 * 1024))

    # Advisory cost estimate for the XLA scheduler.
    bytes_in = (B_pad * Dp * 2 + Dp * Ep * 2 + Ep * Dp * 2 + (Ep + Dp) * 4)
    bytes_out = B_pad * (Ep + Dp) * out_isz
    cost = pl.CostEstimate(
        flops=4 * B_pad * Dp * Ep,          # two matmuls
        transcendentals=B_pad * Dp,         # sigmoid exp
        bytes_accessed=bytes_in + bytes_out,
    )

    enc_pad, dec_pad = pl.pallas_call(
        autoencoder_kernel,
        out_shape=(
            jax.ShapeDtypeStruct((B_pad, Ep), out_dtype),
            jax.ShapeDtypeStruct((B_pad, Dp), out_dtype),
        ),
        grid_spec=pltpu.PrefetchScalarGridSpec(
            num_scalar_prefetch=0,
            grid=grid,
            in_specs=[
                pl.BlockSpec((tile_b, Dp), lambda i: (i, 0)),            # x tile
                pl.BlockSpec((Dp, Ep), lambda i: (0, 0),
                             pipeline_mode=pl.Buffered(1)),              # w1 resident
                pl.BlockSpec((1, Ep), lambda i: (0, 0)),                 # b1
                pl.BlockSpec((Ep, Dp), lambda i: (0, 0),
                             pipeline_mode=pl.Buffered(1)),              # w2 resident
                pl.BlockSpec((1, Dp), lambda i: (0, 0)),                 # b2
            ],
            out_specs=[
                pl.BlockSpec((tile_b, Ep), lambda i: (i, 0)),            # encoded tile
                pl.BlockSpec((tile_b, Dp), lambda i: (i, 0)),            # decoded tile
            ],
        ),
        compiler_params=pltpu.CompilerParams(
            dimension_semantics=("parallel",),
            vmem_limit_bytes=vmem_limit,
        ),
        cost_estimate=cost,
    )(x_prep, params["w1"], params["b1"], params["w2"], params["b2"])

    # Slice the zero-padded lanes / rows back off.
    return enc_pad[:B, :E], dec_pad[:B, :D]


def init_params(key, input_dim, encoding_dim):
    """Deterministic init mimicking torch.nn.Linear (uniform(-1/sqrt(fan_in), +))."""
    k1, k2, k3, k4 = jax.random.split(key, 4)
    bound1 = 1.0 / jnp.sqrt(jnp.float32(input_dim))
    bound2 = 1.0 / jnp.sqrt(jnp.float32(encoding_dim))
    # stored already transposed: (in, out)
    w1 = jax.random.uniform(k1, (input_dim, encoding_dim), jnp.float32, -bound1, bound1)
    b1 = jax.random.uniform(k2, (1, encoding_dim), jnp.float32, -bound1, bound1)
    w2 = jax.random.uniform(k3, (encoding_dim, input_dim), jnp.float32, -bound2, bound2)
    b2 = jax.random.uniform(k4, (1, input_dim), jnp.float32, -bound2, bound2)
    return w1, b1, w2, b2


if __name__ == "__main__":
    # Small shapes consistent with the module: batch=8, input_dim=32, encoding_dim=5
    B, D, E = 8, 32, 5
    key = jax.random.PRNGKey(0)
    kx, kp = jax.random.split(key)
    x = jax.random.uniform(kx, (B, D), jnp.float32)  # e.g. ratings in [0,1)
    w1, b1, w2, b2 = init_params(kp, D, E)

    params = prepare_params(w1, b1, w2, b2)   # one-time pad + bf16 cast
    encoded, decoded = autoencoder_forward(x, params)
    encoded, decoded = jax.block_until_ready((encoded, decoded))

    # Reference check in plain JAX (same math as the PyTorch module, f32).
    enc_ref = jnp.maximum(x @ w1 + b1, 0.0)
    dec_ref = jax.nn.sigmoid(enc_ref @ w2 + b2)
    assert encoded.shape == (B, E) and decoded.shape == (B, D)
    # Loose tolerance: bf16 MXU inputs + bf16 output writeback, f32 accumulation.
    enc_err = float(jnp.max(jnp.abs(encoded.astype(jnp.float32) - enc_ref)))
    dec_err = float(jnp.max(jnp.abs(decoded.astype(jnp.float32) - dec_ref)))
    assert enc_err < 3e-2, enc_err
    assert dec_err < 3e-2, dec_err

    print("KERNEL_OK")
</pallas_src>

<mosaic_0001>
module attributes {stable_mosaic.version = 11 : i64} {
  func.func @autoencoder_kernel(%arg0: i32, %arg1: memref<8x128xbf16, #tpu.memory_space<vmem>>, %arg2: memref<128x128xbf16, #tpu.memory_space<vmem>>, %arg3: memref<1x128xf32, #tpu.memory_space<vmem>>, %arg4: memref<128x128xbf16, #tpu.memory_space<vmem>>, %arg5: memref<1x128xf32, #tpu.memory_space<vmem>>, %arg6: memref<8x128xbf16, #tpu.memory_space<vmem>>, %arg7: memref<8x128xbf16, #tpu.memory_space<vmem>>) attributes {dimension_semantics = [#tpu.dimension_semantics<parallel>], iteration_bounds = array<i64: 1>, scalar_prefetch = 0 : i64, scratch_operands = 0 : i64, tpu.core_type = #tpu.core_type<tc>, window_params = [{transform_indices = @transform_0, window_bounds = array<i64: 8, 128>}, {pipeline_mode = #tpu.pipeline_mode<synchronous>, transform_indices = @transform_1, window_bounds = array<i64: 128, 128>}, {pipeline_mode = #tpu.pipeline_mode<synchronous>, transform_indices = @transform_2, window_bounds = array<i64: 1, 128>}, {pipeline_mode = #tpu.pipeline_mode<synchronous>, transform_indices = @transform_3, window_bounds = array<i64: 128, 128>}, {pipeline_mode = #tpu.pipeline_mode<synchronous>, transform_indices = @transform_4, window_bounds = array<i64: 1, 128>}, {transform_indices = @transform_5, window_bounds = array<i64: 8, 128>}, {transform_indices = @transform_6, window_bounds = array<i64: 8, 128>}]} {
    %c0 = arith.constant 0 : index
    %c0_0 = arith.constant 0 : index
    %0 = vector.load %arg1[%c0, %c0_0] : memref<8x128xbf16, #tpu.memory_space<vmem>>, vector<8x128xbf16>
    %c0_1 = arith.constant 0 : index
    %c0_2 = arith.constant 0 : index
    %1 = vector.load %arg2[%c0_1, %c0_2] : memref<128x128xbf16, #tpu.memory_space<vmem>>, vector<128x128xbf16>
    %cst = arith.constant dense<0.000000e+00> : vector<8x128xf32>
    %2 = tpu.matmul %0, %1, %cst {dimension_numbers = #tpu.dot_dimension_numbers<[1], [0], [0], [1], [0, 0, 1, 1], [], []>} : vector<8x128xbf16>, vector<128x128xbf16>, vector<8x128xf32> -> vector<8x128xf32>
    %c0_3 = arith.constant 0 : index
    %c0_4 = arith.constant 0 : index
    %3 = vector.load %arg3[%c0_3, %c0_4] : memref<1x128xf32, #tpu.memory_space<vmem>>, vector<1x128xf32>
    %4 = vector.broadcast %3 : vector<1x128xf32> to vector<8x128xf32>
    %5 = arith.addf %2, %4 : vector<8x128xf32>
    %cst_5 = arith.constant 0.000000e+00 : f32
    %6 = vector.broadcast %cst_5 : f32 to vector<8x128xf32>
    %7 = arith.maximumf %5, %6 : vector<8x128xf32>
    %8 = arith.truncf %7 : vector<8x128xf32> to vector<8x128xbf16>
    %c0_6 = arith.constant 0 : index
    %c0_7 = arith.constant 0 : index
    %9 = vector.load %arg6[%c0_6, %c0_7] : memref<8x128xbf16, #tpu.memory_space<vmem>>, vector<8x128xbf16>
    tpu.vector_store %arg6[%c0_6, %c0_7], %8 {strides = array<i32>} : memref<8x128xbf16, #tpu.memory_space<vmem>>, vector<8x128xbf16>,
    %c0_8 = arith.constant 0 : index
    %c0_9 = arith.constant 0 : index
    %10 = vector.load %arg4[%c0_8, %c0_9] : memref<128x128xbf16, #tpu.memory_space<vmem>>, vector<128x128xbf16>
    %cst_10 = arith.constant dense<0.000000e+00> : vector<8x128xf32>
    %11 = tpu.matmul %8, %10, %cst_10 {dimension_numbers = #tpu.dot_dimension_numbers<[1], [0], [0], [1], [0, 0, 1, 1], [], []>} : vector<8x128xbf16>, vector<128x128xbf16>, vector<8x128xf32> -> vector<8x128xf32>
    %c0_11 = arith.constant 0 : index
    %c0_12 = arith.constant 0 : index
    %12 = vector.load %arg5[%c0_11, %c0_12] : memref<1x128xf32, #tpu.memory_space<vmem>>, vector<1x128xf32>
    %13 = vector.broadcast %12 : vector<1x128xf32> to vector<8x128xf32>
    %14 = arith.addf %11, %13 : vector<8x128xf32>
    %15 = arith.negf %14 : vector<8x128xf32>
    %16 = math.exp %15 : vector<8x128xf32>
    %cst_13 = arith.constant 1.000000e+00 : f32
    %17 = vector.broadcast %cst_13 : f32 to vector<8x128xf32>
    %18 = arith.addf %17, %16 : vector<8x128xf32>
    %19 = arith.divf %17, %18 : vector<8x128xf32>
    %20 = arith.truncf %19 : vector<8x128xf32> to vector<8x128xbf16>
    %c0_14 = arith.constant 0 : index
    %c0_15 = arith.constant 0 : index
    %21 = vector.load %arg7[%c0_14, %c0_15] : memref<8x128xbf16, #tpu.memory_space<vmem>>, vector<8x128xbf16>
    tpu.vector_store %arg7[%c0_14, %c0_15], %20 {strides = array<i32>} : memref<8x128xbf16, #tpu.memory_space<vmem>>, vector<8x128xbf16>,
    return
  }
  func.func @transform_0(%arg0: i32) -> (i32, i32) {
    %c0_i32 = arith.constant 0 : i32
    %c0_i32_0 = arith.constant 0 : i32
    return %arg0, %c0_i32 : i32, i32
  }
  func.func @transform_1(%arg0: i32) -> (i32, i32) {
    %c0_i32 = arith.constant 0 : i32
    %c0_i32_0 = arith.constant 0 : i32
    %c0_i32_1 = arith.constant 0 : i32
    return %c0_i32, %c0_i32_0 : i32, i32
  }
  func.func @transform_2(%arg0: i32) -> (i32, i32) {
    %c0_i32 = arith.constant 0 : i32
    %c0_i32_0 = arith.constant 0 : i32
    %c0_i32_1 = arith.constant 0 : i32
    return %c0_i32, %c0_i32_0 : i32, i32
  }
  func.func @transform_3(%arg0: i32) -> (i32, i32) {
    %c0_i32 = arith.constant 0 : i32
    %c0_i32_0 = arith.constant 0 : i32
    %c0_i32_1 = arith.constant 0 : i32
    return %c0_i32, %c0_i32_0 : i32, i32
  }
  func.func @transform_4(%arg0: i32) -> (i32, i32) {
    %c0_i32 = arith.constant 0 : i32
    %c0_i32_0 = arith.constant 0 : i32
    %c0_i32_1 = arith.constant 0 : i32
    return %c0_i32, %c0_i32_0 : i32, i32
  }
  func.func @transform_5(%arg0: i32) -> (i32, i32) {
    %c0_i32 = arith.constant 0 : i32
    %c0_i32_0 = arith.constant 0 : i32
    return %arg0, %c0_i32 : i32, i32
  }
  func.func @transform_6(%arg0: i32) -> (i32, i32) {
    %c0_i32 = arith.constant 0 : i32
    %c0_i32_0 = arith.constant 0 : i32
    return %arg0, %c0_i32 : i32, i32
  }
}

</mosaic_0001>

<llo_original>
// kernel: tpu_custom_call.1
$region0: #{tpu_custom_call.1}
  #allocation0 [shape = 'u32[]', space=smem, size = 0x4, offset = 0x4, fixed_abs, tag = 'smem constant byte address 0x4 - core index']
  #allocation1 [shape = 'u32[144,128]{1,0:T(1,128)}', space=vmem, size = 0x12000, scoped, tag = 'internal scratch']
  %s0 = inlined_call_operand.hbm [shape: bf16[8,128], index: 0, kind: input, shape index: {}]
  %s1 = inlined_call_operand.hbm [shape: bf16[128,128], index: 1, kind: input, shape index: {}]
  %s2 = inlined_call_operand.vmem [shape: f32[1,128], index: 2, kind: input, shape index: {}]
  %s3 = inlined_call_operand.hbm [shape: bf16[128,128], index: 3, kind: input, shape index: {}]
  %s4 = inlined_call_operand.vmem [shape: f32[1,128], index: 4, kind: input, shape index: {}]
  %s5 = inlined_call_operand.hbm [shape: bf16[8,128], index: 5, kind: output, shape index: {0}]
  %s6 = inlined_call_operand.hbm [shape: bf16[8,128], index: 6, kind: output, shape index: {1}]
  %7 = xla_tuple %s5, %s6
  %s8 = sld [smem:[#allocation0]]
  $region50: #{tpu_custom_call.1} parent=0
    _
  %s10 = ssub.s32 1, %s8
  %s11 = scalar_select 0, %s10, %s8
  $region1: #{tpu_custom_call.1} parent=0
    #allocation2 [shape = 'u8[2048]{0}', space=vmem, size = 0x800, scoped, tag = 'input window, operand 0, single buffered']
    #allocation3 [shape = 's32[1]{0}', space=sflag, size = 0x4, scoped, tag = 'scoped memory for tpu_custom_call.1']
    #allocation4 [shape = 's32[1]{0}', space=sflag, size = 0x4, scoped, tag = 'scoped memory for tpu_custom_call.1']
    #allocation5 [shape = 'u8[32768]{0}', space=vmem, size = 0x8000, scoped, tag = 'input window, operand 1, single buffered']
    #allocation6 [shape = 's32[1]{0}', space=sflag, size = 0x4, scoped, tag = 'scoped memory for tpu_custom_call.1']
    #allocation7 [shape = 'u8[32768]{0}', space=vmem, size = 0x8000, scoped, tag = 'input window, operand 3, single buffered']
    #allocation8 [shape = 'u8[2048]{0}', space=vmem, size = 0x800, scoped, tag = 'output window, operand 0, single buffered']
    #allocation9 [shape = 'u8[2048]{0}', space=vmem, size = 0x800, scoped, tag = 'output window, operand 1, single buffered']
    #allocation10 [shape = 's32[1]{0}', space=sflag, size = 0x4, scoped, tag = 'scoped memory for tpu_custom_call.1']
    %12 = vsyncpa [#allocation3], 0
    %13 = vsyncpa [#allocation6], 0
    %14 = vsyncpa [#allocation4], 0
    %15 = vsyncpa [#allocation10], 0
    // Predicated region
    $region2: #{tpu_custom_call.1} parent=1 // pred_check
      _
    $region3: #{tpu_custom_call.1} parent=1 // pred_check_branch
      %17 = sbr.rel (0) target = $region5
    $region4: #{tpu_custom_call.1} parent=1 // pred_region
      %s19 = ssub.s32 64, 64
      %20 = vsyncadd [#allocation3], %s19
      %s22 = sshll.u32 [#allocation2], 4
      %s23 = int_to_ptr.vmem [resolvable:$true] %s22
      %25 = dma.hbm_to_vmem [thread:$0]  %s0, 64, %s23, [#allocation3]
    $region5: #{tpu_custom_call.1} parent=1 // pred_fallthru
      _
    // Predicated region
    $region6: #{tpu_custom_call.1} parent=1 // pred_check
      _
    $region7: #{tpu_custom_call.1} parent=1 // pred_check_branch
      %27 = sbr.rel (0) target = $region9
    $region8: #{tpu_custom_call.1} parent=1 // pred_region
      %s29 = ssub.s32 1024, 1024
      %30 = vsyncadd [#allocation6], %s29
      %s31 = sshll.u32 [#allocation5], 4
      %s32 = int_to_ptr.vmem [resolvable:$true] %s31
      %37 = dma.hbm_to_vmem [thread:$0]  %s1, 1024, %s32, [#allocation6], 64, 64, 4
    $region9: #{tpu_custom_call.1} parent=1 // pred_fallthru
      _
    // Predicated region
    $region10: #{tpu_custom_call.1} parent=1 // pred_check
      _
    $region11: #{tpu_custom_call.1} parent=1 // pred_check_branch
      %39 = sbr.rel (0) target = $region13
    $region12: #{tpu_custom_call.1} parent=1 // pred_region
      _
    $region13: #{tpu_custom_call.1} parent=1 // pred_fallthru
      _
    // Predicated region
    $region14: #{tpu_custom_call.1} parent=1 // pred_check
      _
    $region15: #{tpu_custom_call.1} parent=1 // pred_check_branch
      %41 = sbr.rel (0) target = $region17
    $region16: #{tpu_custom_call.1} parent=1 // pred_region
      %s43 = ssub.s32 1024, 1024
      %44 = vsyncadd [#allocation6], %s43
      %s45 = sshll.u32 [#allocation7], 4
      %s46 = int_to_ptr.vmem [resolvable:$true] %s45
      %51 = dma.hbm_to_vmem [thread:$0]  %s3, 1024, %s46, [#allocation6], 64, 64, 4
    $region17: #{tpu_custom_call.1} parent=1 // pred_fallthru
      _
    // Predicated region
    $region18: #{tpu_custom_call.1} parent=1 // pred_check
      _
    $region19: #{tpu_custom_call.1} parent=1 // pred_check_branch
      %53 = sbr.rel (0) target = $region21
    $region20: #{tpu_custom_call.1} parent=1 // pred_region
      _
    $region21: #{tpu_custom_call.1} parent=1 // pred_fallthru
      _
    // Predicated region
    $region22: #{tpu_custom_call.1} parent=1 // pred_check
      _
    $region23: #{tpu_custom_call.1} parent=1 // pred_check_branch
      %55 = sbr.rel (0) target = $region25
    $region24: #{tpu_custom_call.1} parent=1 // pred_region
      %56 = dma.done [#allocation3], 64
    $region25: #{tpu_custom_call.1} parent=1 // pred_fallthru
      _
    // Predicated region
    $region26: #{tpu_custom_call.1} parent=1 // pred_check
      _
    $region27: #{tpu_custom_call.1} parent=1 // pred_check_branch
      %58 = sbr.rel (0) target = $region29
    $region28: #{tpu_custom_call.1} parent=1 // pred_region
      %59 = dma.done [#allocation6], 1024
    $region29: #{tpu_custom_call.1} parent=1 // pred_fallthru
      _
    // Predicated region
    $region30: #{tpu_custom_call.1} parent=1 // pred_check
      _
    $region31: #{tpu_custom_call.1} parent=1 // pred_check_branch
      %61 = sbr.rel (0) target = $region33
    $region32: #{tpu_custom_call.1} parent=1 // pred_region
      %62 = dma.done [#allocation6], 1024
    $region33: #{tpu_custom_call.1} parent=1 // pred_fallthru
      _
    %v64 = vld [vmem:[#allocation2] sm:$0xf]
    %v65 = vld [vmem:[#allocation5] sm:$0xf]
    %v66 = vld [vmem:[#allocation5 + $0x4] sm:$0xf]
    %v67 = vld [vmem:[#allocation5 + $0x8] sm:$0xf]
    %v68 = vld [vmem:[#allocation5 + $0xc] sm:$0xf]
    %v69 = vld [vmem:[#allocation5 + $0x10] sm:$0xf]
    %v70 = vld [vmem:[#allocation5 + $0x14] sm:$0xf]
    %v71 = vld [vmem:[#allocation5 + $0x18] sm:$0xf]
    %v72 = vld [vmem:[#allocation5 + $0x1c] sm:$0xf]
    %v73 = vld [vmem:[#allocation5 + $0x20] sm:$0xf]
    %v74 = vld [vmem:[#allocation5 + $0x24] sm:$0xf]
    %v75 = vld [vmem:[#allocation5 + $0x28] sm:$0xf]
    %v76 = vld [vmem:[#allocation5 + $0x2c] sm:$0xf]
    %v77 = vld [vmem:[#allocation5 + $0x30] sm:$0xf]
    %v78 = vld [vmem:[#allocation5 + $0x34] sm:$0xf]
    %v79 = vld [vmem:[#allocation5 + $0x38] sm:$0xf]
    %v80 = vld [vmem:[#allocation5 + $0x3c] sm:$0xf]
    %v81 = vld [vmem:[%s2] sm:$0x1]
    %v83 = vlaneseq
    %v84 = vshrl.u32 %v83, 7
    %v85 = vsub.s32 0, %v84
    %v86 = vrot.slane %v81, %v85
    %v104 = vunpack.c.l.b16 %v65
    %v105 = vunpack.c.l.b16 %v66
    %v106 = vunpack.c.l.b16 %v67
    %v107 = vunpack.c.l.b16 %v68
    %v108 = vunpack.c.l.b16 %v69
    %v109 = vunpack.c.l.b16 %v70
    %v110 = vunpack.c.l.b16 %v71
    %v111 = vunpack.c.l.b16 %v72
    %v112 = vunpack.c.l.b16 %v73
    %v113 = vunpack.c.l.b16 %v74
    %v114 = vunpack.c.l.b16 %v75
    %v115 = vunpack.c.l.b16 %v76
    %v116 = vunpack.c.l.b16 %v77
    %v117 = vunpack.c.l.b16 %v78
    %v118 = vunpack.c.l.b16 %v79
    %v119 = vunpack.c.l.b16 %v80
    %v120 = vpack.c.b16 %v105, %v104
    %v121 = vpack.c.b16 %v107, %v106
    %v122 = vpack.c.b16 %v109, %v108
    %v123 = vpack.c.b16 %v111, %v110
    %v124 = vpack.c.b16 %v113, %v112
    %v125 = vpack.c.b16 %v115, %v114
    %v126 = vpack.c.b16 %v117, %v116
    %v127 = vpack.c.b16 %v119, %v118
    %136 = vmatprep.subr.bf16.mxu0 0
    %137 = vmatpush1.bf16.msra.mxu0 %v127
    %138 = vmatprep.subr.bf16.mxu0 0
    %139 = vmatpush1.bf16.msra.mxu0 %v126
    %140 = vmatprep.subr.bf16.mxu0 0
    %141 = vmatpush1.bf16.msra.mxu0 %v125
    %142 = vmatprep.subr.bf16.mxu0 0
    %143 = vmatpush1.bf16.msra.mxu0 %v124
    %144 = vmatprep.subr.bf16.mxu0 0
    %145 = vmatpush1.bf16.msra.mxu0 %v123
    %146 = vmatprep.subr.bf16.mxu0 0
    %147 = vmatpush1.bf16.msra.mxu0 %v122
    %148 = vmatprep.subr.bf16.mxu0 0
    %149 = vmatpush1.bf16.msra.mxu0 %v121
    %150 = vmatprep.subr.bf16.mxu0 0
    %151 = vmatpush1.bf16.msra.mxu0 %v120
    %152 = vmatprep.subr.bf16.mxu0 0
    %153 = vmatpush2.bf16.msra.mxu0 0
    %154 = vmatprep.subr.bf16.mxu0 0
    %155 = vmatpush2.bf16.msra.mxu0 0
    %156 = vmatprep.subr.bf16.mxu0 0
    %157 = vmatpush2.bf16.msra.mxu0 0
    %158 = vmatprep.subr.bf16.mxu0 0
    %159 = vmatpush2.bf16.msra.mxu0 0
    %160 = vmatprep.subr.bf16.mxu0 0
    %161 = vmatpush2.bf16.msra.mxu0 0
    %162 = vmatprep.subr.bf16.mxu0 0
    %163 = vmatpush2.bf16.msra.mxu0 0
    %164 = vmatprep.subr.bf16.mxu0 0
    %165 = vmatpush2.bf16.msra.mxu0 0
    %166 = vmatprep.subr.bf16.mxu0 0
    %167 = vmatpush2.bf16.msra.mxu0 0
    %168 = vmatprep.mubr.bf16.mxu0 0
    %169 = vmatmul.mubr.bf16.gmra.mxu0 %v64
    %v170 = vpop.f32.mrf.mxu0
    %v171 = vadd.f32 %v86, %v170
    %v172 = vpop.f32.mrf.mxu0
    %v173 = vpop.f32.mrf.mxu0
    %v174 = vpop.f32.mrf.mxu0
    %175 = vdwg.mxu0
    %v176 = vmax.f32 %v171, 0.0
    %v177 = vpack.c.bf16 %v176, %v176
    %178 = vst [vmem:[#allocation8] sm:$0xf] %v177
    %v179 = vld [vmem:[#allocation7] sm:$0xf]
    %v180 = vld [vmem:[#allocation7 + $0x4] sm:$0xf]
    %v181 = vld [vmem:[#allocation7 + $0x8] sm:$0xf]
    %v182 = vld [vmem:[#allocation7 + $0xc] sm:$0xf]
    %v183 = vld [vmem:[#allocation7 + $0x10] sm:$0xf]
    %v184 = vld [vmem:[#allocation7 + $0x14] sm:$0xf]
    %v185 = vld [vmem:[#allocation7 + $0x18] sm:$0xf]
    %v186 = vld [vmem:[#allocation7 + $0x1c] sm:$0xf]
    %v187 = vld [vmem:[#allocation7 + $0x20] sm:$0xf]
    %v188 = vld [vmem:[#allocation7 + $0x24] sm:$0xf]
    %v189 = vld [vmem:[#allocation7 + $0x28] sm:$0xf]
    %v190 = vld [vmem:[#allocation7 + $0x2c] sm:$0xf]
    %v191 = vld [vmem:[#allocation7 + $0x30] sm:$0xf]
    %v192 = vld [vmem:[#allocation7 + $0x34] sm:$0xf]
    %v193 = vld [vmem:[#allocation7 + $0x38] sm:$0xf]
    %v194 = vld [vmem:[#allocation7 + $0x3c] sm:$0xf]
    %v195 = vld [vmem:[%s4] sm:$0x1]
    %v197 = vlaneseq
    %v198 = vshrl.u32 %v197, 7
    %v199 = vsub.s32 0, %v198
    %v200 = vrot.slane %v195, %v199
    %v218 = vunpack.c.l.b16 %v179
    %v219 = vunpack.c.l.b16 %v180
    %v220 = vunpack.c.l.b16 %v181
    %v221 = vunpack.c.l.b16 %v182
    %v222 = vunpack.c.l.b16 %v183
    %v223 = vunpack.c.l.b16 %v184
    %v224 = vunpack.c.l.b16 %v185
    %v225 = vunpack.c.l.b16 %v186
    %v226 = vunpack.c.l.b16 %v187
    %v227 = vunpack.c.l.b16 %v188
    %v228 = vunpack.c.l.b16 %v189
    %v229 = vunpack.c.l.b16 %v190
    %v230 = vunpack.c.l.b16 %v191
    %v231 = vunpack.c.l.b16 %v192
    %v232 = vunpack.c.l.b16 %v193
    %v233 = vunpack.c.l.b16 %v194
    %v234 = vpack.c.b16 %v219, %v218
    %v235 = vpack.c.b16 %v221, %v220
    %v236 = vpack.c.b16 %v223, %v222
    %v237 = vpack.c.b16 %v225, %v224
    %v238 = vpack.c.b16 %v227, %v226
    %v239 = vpack.c.b16 %v229, %v228
    %v240 = vpack.c.b16 %v231, %v230
    %v241 = vpack.c.b16 %v233, %v232
    %250 = vmatprep.subr.bf16.mxu0 0
    %251 = vmatpush1.bf16.msra.mxu0 %v241
    %252 = vmatprep.subr.bf16.mxu0 0
    %253 = vmatpush1.bf16.msra.mxu0 %v240
    %254 = vmatprep.subr.bf16.mxu0 0
    %255 = vmatpush1.bf16.msra.mxu0 %v239
    %256 = vmatprep.subr.bf16.mxu0 0
    %257 = vmatpush1.bf16.msra.mxu0 %v238
    %258 = vmatprep.subr.bf16.mxu0 0
    %259 = vmatpush1.bf16.msra.mxu0 %v237
    %260 = vmatprep.subr.bf16.mxu0 0
    %261 = vmatpush1.bf16.msra.mxu0 %v236
    %262 = vmatprep.subr.bf16.mxu0 0
    %263 = vmatpush1.bf16.msra.mxu0 %v235
    %264 = vmatprep.subr.bf16.mxu0 0
    %265 = vmatpush1.bf16.msra.mxu0 %v234
    %266 = vmatprep.subr.bf16.mxu0 0
    %267 = vmatpush2.bf16.msra.mxu0 0
    %268 = vmatprep.subr.bf16.mxu0 0
    %269 = vmatpush2.bf16.msra.mxu0 0
    %270 = vmatprep.subr.bf16.mxu0 0
    %271 = vmatpush2.bf16.msra.mxu0 0
    %272 = vmatprep.subr.bf16.mxu0 0
    %273 = vmatpush2.bf16.msra.mxu0 0
    %274 = vmatprep.subr.bf16.mxu0 0
    %275 = vmatpush2.bf16.msra.mxu0 0
    %276 = vmatprep.subr.bf16.mxu0 0
    %277 = vmatpush2.bf16.msra.mxu0 0
    %278 = vmatprep.subr.bf16.mxu0 0
    %279 = vmatpush2.bf16.msra.mxu0 0
    %280 = vmatprep.subr.bf16.mxu0 0
    %281 = vmatpush2.bf16.msra.mxu0 0
    %282 = vmatprep.mubr.bf16.mxu0 0
    %283 = vmatmul.mubr.bf16.gmra.mxu0 %v177
    %v284 = vpop.f32.mrf.mxu0
    %v285 = vadd.f32 %v200, %v284
    %v286 = vpop.f32.mrf.mxu0
    %v287 = vpop.f32.mrf.mxu0
    %v288 = vpop.f32.mrf.mxu0
    %289 = vdwg.mxu0
    %v290 = vxor.u32 %v285, 2147483648
    %v291 = vmul.f32 %v290, 1.442695
    %v292 = vpow.pop %v291
    %v293 = vadd.f32 %v292, 1.0
    %v294 = vrcp.pop %v293
    %v295 = vmul.f32 1.0, %v294
    %v296 = vpack.c.bf16 %v295, %v295
    %297 = vst [vmem:[#allocation9] sm:$0xf] %v296
    // Predicated region
    $region34: #{tpu_custom_call.1} parent=1 // pred_check
      _
    $region35: #{tpu_custom_call.1} parent=1 // pred_check_branch
      %299 = sbr.rel (0) target = $region37
    $region36: #{tpu_custom_call.1} parent=1 // pred_region
      %s301 = ssub.s32 64, 64
      %302 = vsyncadd [#allocation4], %s301
      %s304 = sshll.u32 [#allocation8], 4
      %s305 = int_to_ptr.vmem [resolvable:$true] %s304
      %307 = dma.vmem_to_hbm [thread:$0]  %s305, 64, %s5, [#allocation4]
    $region37: #{tpu_custom_call.1} parent=1 // pred_fallthru
      _
    // Predicated region
    $region38: #{tpu_custom_call.1} parent=1 // pred_check
      _
    $region39: #{tpu_custom_call.1} parent=1 // pred_check_branch
      %309 = sbr.rel (0) target = $region41
    $region40: #{tpu_custom_call.1} parent=1 // pred_region
      %s311 = ssub.s32 64, 64
      %312 = vsyncadd [#allocation10], %s311
      %s314 = sshll.u32 [#allocation9], 4
      %s315 = int_to_ptr.vmem [resolvable:$true] %s314
      %317 = dma.vmem_to_hbm [thread:$0]  %s315, 64, %s6, [#allocation10]
    $region41: #{tpu_custom_call.1} parent=1 // pred_fallthru
      _
    // Predicated region
    $region42: #{tpu_custom_call.1} parent=1 // pred_check
      _
    $region43: #{tpu_custom_call.1} parent=1 // pred_check_branch
      %319 = sbr.rel (0) target = $region45
    $region44: #{tpu_custom_call.1} parent=1 // pred_region
      %320 = dma.done [#allocation4], 64
    $region45: #{tpu_custom_call.1} parent=1 // pred_fallthru
      _
    // Predicated region
    $region46: #{tpu_custom_call.1} parent=1 // pred_check
      _
    $region47: #{tpu_custom_call.1} parent=1 // pred_check_branch
      %322 = sbr.rel (0) target = $region49
    $region48: #{tpu_custom_call.1} parent=1 // pred_region
      %323 = dma.done [#allocation10], 64
    $region49: #{tpu_custom_call.1} parent=1 // pred_fallthru
      _
    %324 = vsyncpa [#allocation3], 1
    %325 = vsyncpa [#allocation6], 1
    %326 = vsyncpa [#allocation4], 1
    %327 = vsyncpa [#allocation10], 1

</llo_original>
